<compile_context>
chip_gen: v7x
topology: tpu7x:2x2x1
jax: 0.10.0
libtpu: 0.0.40
codegen_flags: <defaults>
</compile_context>

<pallas_src>
import functools

import jax
import jax.numpy as jnp
from jax.experimental import pallas as pl
from jax.experimental.pallas import tpu as pltpu


def rotary_kernel(x_ref, cos_ref, sin_ref, o_ref, *, head_dim):
    # x_ref / o_ref: (tt, H*D) block (batch dim squeezed by BlockSpec).
    # cos_ref / sin_ref: (tt, H*D) f32 coefficient tables for this t tile.
    half = head_dim // 2
    x = x_ref[...]
    hd = x.shape[-1]

    # roll(x, s)[j] = x[(j - s) mod hd]  (jnp.roll semantics, XLU rotate)
    x_fwd = pltpu.roll(x, shift=hd - half, axis=1)   # x[(j + half) mod hd]
    x_bwd = pltpu.roll(x, shift=half, axis=1)        # x[(j - half) mod hd]

    # Within-head lane index: first half pairs with +half, second with -half.
    lane = jax.lax.broadcasted_iota(jnp.int32, (1, hd), 1)
    in_first_half = (lane % head_dim) < half
    x_rot = jnp.where(in_first_half, x_fwd, x_bwd)

    # Signs are baked into sin_f; f32 promotion happens via the f32 tables.
    o_ref[...] = (x * cos_ref[...] + x_rot * sin_ref[...]).astype(o_ref.dtype)


def rotary(x, base=10000.0, t_tile=256):
    """Apply rotary embedding. x: [B, T, H, D] (any float dtype, e.g. bf16)."""
    B, T, H, D = x.shape
    assert D % 2 == 0, "head dim must be even"
    half = D // 2
    HD = H * D

    # Deterministic tables matching the PyTorch buffer + cached cos/sin:
    #   inv_freq = (1/base) ** (arange(0, D, 2) / D);  freqs = outer(t, inv_freq)
    inv_freq = (1.0 / base) ** (jnp.arange(0, D, 2, dtype=jnp.float32) / D)
    t = jnp.arange(T, dtype=jnp.float32)
    freqs = jnp.outer(t, inv_freq)                       # (T, D/2)
    cos_h = jnp.cos(freqs)
    sin_h = jnp.sin(freqs)
    # Flattened-head layout j = h*D + i:
    #   cos_f[j] = cos(f_{i mod half});  sin_f[j] = +sin(f_i) (i<half) / -sin(f_{i-half})
    cos_d = jnp.concatenate([cos_h, cos_h], axis=-1)     # (T, D)
    sin_d = jnp.concatenate([sin_h, -sin_h], axis=-1)    # (T, D)
    cos_f = jnp.tile(cos_d, (1, H))                      # (T, H*D)
    sin_f = jnp.tile(sin_d, (1, H))                      # (T, H*D)

    # Flatten heads into the lane axis (free, contiguous reshape) -> lane-dense I/O.
    x_flat = x.reshape(B, T, HD)

    # Sequence tile: amortize the ~0.35us per-step overhead, but clamp so that
    # double-buffered {x, cos, sin, out} tiles plus ~4 full-tile f32 temps stay
    # within a 48 MiB scoped-VMEM budget (safe on v7x's 64 MiB physical VMEM).
    tt = min(t_tile, T)
    vmem_budget = 48 * 1024 * 1024
    bytes_per_row = HD * (2 * 2 * x.dtype.itemsize + 2 * 2 * 4 + 4 * 4)
    max_tt = max(16, ((vmem_budget * 4 // 5) // bytes_per_row) // 16 * 16)
    if tt > max_tt:
        tt = max_tt

    # Grid: t tiles (parallel, sharded across TensorCores) x batch (innermost,
    # arbitrary) -> cos/sin block index is constant over b, so their DMA is
    # elided across the batch loop.
    grid = (pl.cdiv(T, tt), B)

    out_flat = pl.pallas_call(
        functools.partial(rotary_kernel, head_dim=D),
        out_shape=jax.ShapeDtypeStruct((B, T, HD), x.dtype),
        grid=grid,
        in_specs=[
            pl.BlockSpec((None, tt, HD), lambda ti, b: (b, ti, 0)),  # x tile
            pl.BlockSpec((tt, HD), lambda ti, b: (ti, 0)),           # cos table
            pl.BlockSpec((tt, HD), lambda ti, b: (ti, 0)),           # sin table
        ],
        out_specs=pl.BlockSpec((None, tt, HD), lambda ti, b: (b, ti, 0)),
        compiler_params=pltpu.CompilerParams(
            dimension_semantics=("parallel", "arbitrary"),
            vmem_limit_bytes=vmem_budget,
        ),
    )(x_flat, cos_f, sin_f)

    return out_flat.reshape(B, T, H, D)


def rotary_ref(x, base=10000.0):
    """Pure-JAX reference mirroring the PyTorch forward exactly."""
    B, T, H, D = x.shape
    inv_freq = (1.0 / base) ** (jnp.arange(0, D, 2, dtype=jnp.float32) / D)
    t = jnp.arange(T, dtype=jnp.float32)
    freqs = jnp.outer(t, inv_freq)                       # (T, D/2)
    cos = jnp.cos(freqs)[None, :, None, :]
    sin = jnp.sin(freqs)[None, :, None, :]
    x1, x2 = jnp.split(x.astype(jnp.float32), 2, axis=3)
    y1 = x1 * cos + x2 * sin
    y2 = -x1 * sin + x2 * cos
    return jnp.concatenate([y1, y2], axis=3).astype(x.dtype)


if __name__ == "__main__":
    # Small f32 test (single tile, HD = 128 lane-dense).
    key = jax.random.PRNGKey(0)
    B, T, H, D = 2, 8, 4, 32
    x = jax.random.normal(key, (B, T, H, D), dtype=jnp.float32)

    out = rotary(x)
    jax.block_until_ready(out)

    ref = rotary_ref(x)
    assert out.shape == (B, T, H, D)
    assert out.dtype == x.dtype
    assert jnp.allclose(out, ref, atol=1e-5, rtol=1e-5), "f32 mismatch vs reference"

    # bf16 + multiple tiles + partial trailing tile coverage.
    B2, T2, H2, D2 = 2, 40, 4, 32
    x2 = jax.random.normal(jax.random.PRNGKey(1), (B2, T2, H2, D2),
                           dtype=jnp.bfloat16)
    out2 = rotary(x2, t_tile=16)
    jax.block_until_ready(out2)
    ref2 = rotary_ref(x2)
    assert out2.shape == (B2, T2, H2, D2)
    assert out2.dtype == x2.dtype
    assert jnp.allclose(out2.astype(jnp.float32), ref2.astype(jnp.float32),
                        atol=2e-2, rtol=2e-2), "bf16 mismatch vs reference"

    print("KERNEL_OK")
</pallas_src>

<mosaic_0001>
module attributes {stable_mosaic.version = 11 : i64} {
  func.func @rotary_kernel(%arg0: i32, %arg1: i32, %arg2: memref<1x8x128xf32, #tpu.memory_space<vmem>>, %arg3: memref<8x128xf32, #tpu.memory_space<vmem>>, %arg4: memref<8x128xf32, #tpu.memory_space<vmem>>, %arg5: memref<1x8x128xf32, #tpu.memory_space<vmem>>) attributes {dimension_semantics = [#tpu.dimension_semantics<parallel>, #tpu.dimension_semantics<arbitrary>], iteration_bounds = array<i64: 1, 2>, scalar_prefetch = 0 : i64, scratch_operands = 0 : i64, tpu.core_type = #tpu.core_type<tc>, window_params = [{transform_indices = @transform_0, window_bounds = array<i64: 1, 8, 128>}, {transform_indices = @transform_1, window_bounds = array<i64: 8, 128>}, {transform_indices = @transform_2, window_bounds = array<i64: 8, 128>}, {transform_indices = @transform_3, window_bounds = array<i64: 1, 8, 128>}]} {
    %c0 = arith.constant 0 : index
    %c0_0 = arith.constant 0 : index
    %c0_1 = arith.constant 0 : index
    %0 = vector.load %arg2[%c0, %c0_0, %c0_1] : memref<1x8x128xf32, #tpu.memory_space<vmem>>, vector<1x8x128xf32>
    %1 = vector.shape_cast %0 : vector<1x8x128xf32> to vector<8x128xf32>
    %c112_i32 = arith.constant 112 : i32
    %2 = tpu.dynamic_rotate %1 by %c112_i32 dim 1 : vector<8x128xf32>, i32 -> vector<8x128xf32>
    %c16_i32 = arith.constant 16 : i32
    %3 = tpu.dynamic_rotate %1 by %c16_i32 dim 1 : vector<8x128xf32>, i32 -> vector<8x128xf32>
    %4 = tpu.iota {dimensions = array<i32: 1>} : vector<1x128xi32>
    %c32_i32 = arith.constant 32 : i32
    %c0_i32 = arith.constant 0 : i32
    %5 = arith.cmpi eq, %c32_i32, %c0_i32 : i32
    %c1_i32 = arith.constant 1 : i32
    %6 = arith.select %5, %c1_i32, %c32_i32 : i32
    %7 = vector.broadcast %6 : i32 to vector<1x128xi32>
    %8 = arith.remsi %4, %7 : vector<1x128xi32>
    %c0_i32_2 = arith.constant 0 : i32
    %9 = vector.broadcast %c0_i32_2 : i32 to vector<1x128xi32>
    %10 = arith.cmpi ne, %8, %9 : vector<1x128xi32>
    %c0_i32_3 = arith.constant 0 : i32
    %11 = vector.broadcast %c0_i32_3 : i32 to vector<1x128xi32>
    %12 = arith.cmpi slt, %8, %11 : vector<1x128xi32>
    %c0_i32_4 = arith.constant 0 : i32
    %13 = arith.cmpi slt, %6, %c0_i32_4 : i32
    %14 = vector.broadcast %13 : i1 to vector<1x128xi1>
    %15 = vector.broadcast %14 : vector<1x128xi1> to vector<1x128xi1>
    %16 = arith.xori %12, %15 : vector<1x128xi1>
    %17 = arith.andi %16, %10 : vector<1x128xi1>
    %18 = vector.broadcast %6 : i32 to vector<1x128xi32>
    %19 = arith.addi %8, %18 : vector<1x128xi32>
    %20 = arith.select %17, %19, %8 : vector<1x128xi1>, vector<1x128xi32>
    %c16_i32_5 = arith.constant 16 : i32
    %21 = vector.broadcast %c16_i32_5 : i32 to vector<1x128xi32>
    %22 = arith.cmpi slt, %20, %21 : vector<1x128xi32>
    %23 = vector.shape_cast %22 : vector<1x128xi1> to vector<1x128xi1>
    %24 = vector.broadcast %23 : vector<1x128xi1> to vector<8x128xi1>
    %25 = arith.select %24, %2, %3 : vector<8x128xi1>, vector<8x128xf32>
    %c0_6 = arith.constant 0 : index
    %c0_7 = arith.constant 0 : index
    %26 = vector.load %arg3[%c0_6, %c0_7] : memref<8x128xf32, #tpu.memory_space<vmem>>, vector<8x128xf32>
    %27 = arith.mulf %1, %26 : vector<8x128xf32>
    %c0_8 = arith.constant 0 : index
    %c0_9 = arith.constant 0 : index
    %28 = vector.load %arg4[%c0_8, %c0_9] : memref<8x128xf32, #tpu.memory_space<vmem>>, vector<8x128xf32>
    %29 = arith.mulf %25, %28 : vector<8x128xf32>
    %30 = arith.addf %27, %29 : vector<8x128xf32>
    %c0_10 = arith.constant 0 : index
    %c0_11 = arith.constant 0 : index
    %c0_12 = arith.constant 0 : index
    %31 = vector.load %arg5[%c0_10, %c0_11, %c0_12] : memref<1x8x128xf32, #tpu.memory_space<vmem>>, vector<1x8x128xf32>
    %32 = vector.shape_cast %31 : vector<1x8x128xf32> to vector<8x128xf32>
    %33 = vector.shape_cast %30 : vector<8x128xf32> to vector<1x8x128xf32>
    tpu.vector_store %arg5[%c0_10, %c0_11, %c0_12], %33 {strides = array<i32>} : memref<1x8x128xf32, #tpu.memory_space<vmem>>, vector<1x8x128xf32>,
    return
  }
  func.func @transform_0(%arg0: i32, %arg1: i32) -> (i32, i32, i32) {
    %c0_i32 = arith.constant 0 : i32
    %c0_i32_0 = arith.constant 0 : i32
    return %arg1, %arg0, %c0_i32 : i32, i32, i32
  }
  func.func @transform_1(%arg0: i32, %arg1: i32) -> (i32, i32) {
    %c0_i32 = arith.constant 0 : i32
    %c0_i32_0 = arith.constant 0 : i32
    return %arg0, %c0_i32 : i32, i32
  }
  func.func @transform_2(%arg0: i32, %arg1: i32) -> (i32, i32) {
    %c0_i32 = arith.constant 0 : i32
    %c0_i32_0 = arith.constant 0 : i32
    return %arg0, %c0_i32 : i32, i32
  }
  func.func @transform_3(%arg0: i32, %arg1: i32) -> (i32, i32, i32) {
    %c0_i32 = arith.constant 0 : i32
    %c0_i32_0 = arith.constant 0 : i32
    return %arg1, %arg0, %c0_i32 : i32, i32, i32
  }
}

</mosaic_0001>

<llo_original>
// kernel: tpu_custom_call.1
$region0: #{tpu_custom_call.1}
  #allocation0 [shape = 'u32[]', space=smem, size = 0x4, offset = 0x4, fixed_abs, tag = 'smem constant byte address 0x4 - core index']
  #allocation1 [shape = 'u32[144,128]{1,0:T(1,128)}', space=vmem, size = 0x12000, scoped, tag = 'internal scratch']
  %s0 = inlined_call_operand.hbm [shape: f32[2,8,128], index: 0, kind: input, shape index: {}]
  %s1 = inlined_call_operand.hbm [shape: f32[8,128], index: 1, kind: input, shape index: {}]
  %s2 = inlined_call_operand.hbm [shape: f32[8,128], index: 2, kind: input, shape index: {}]
  %s3 = inlined_call_operand.hbm [shape: f32[2,8,128], index: 3, kind: output, shape index: {}]
  %s4 = sld [smem:[#allocation0]]
  $region57: #{tpu_custom_call.1} parent=0
    _
  %s6 = ssub.s32 1, %s4
  %s7 = scalar_select 0, %s6, %s4
  $region1: #{tpu_custom_call.1} parent=0
    #allocation2 [shape = 'u8[8192]{0}', space=vmem, size = 0x2000, scoped, tag = 'input window, operand 0']
    #allocation3 [shape = 's32[2]{0}', space=sflag, size = 0x8, scoped, tag = 'scoped memory for tpu_custom_call.1']
    #allocation4 [shape = 's32[2]{0}', space=sflag, size = 0x8, scoped, tag = 'scoped memory for tpu_custom_call.1']
    #allocation5 [shape = 'u8[4096]{0}', space=vmem, size = 0x1000, scoped, tag = 'input window, operand 1, single buffered']
    #allocation6 [shape = 's32[1]{0}', space=sflag, size = 0x4, scoped, tag = 'scoped memory for tpu_custom_call.1']
    #allocation7 [shape = 'u8[4096]{0}', space=vmem, size = 0x1000, scoped, tag = 'input window, operand 2, single buffered']
    #allocation8 [shape = 'u8[8192]{0}', space=vmem, size = 0x2000, scoped, tag = 'output window, operand 0']
    %8 = vsyncpa [#allocation3], 0
    %s9 = scalar_lea.sflag [#allocation3], 1
    %10 = vsyncpa %s9, 0
    %11 = vsyncpa [#allocation6], 0
    %12 = vsyncpa [#allocation4], 0
    %s13 = scalar_lea.sflag [#allocation4], 1
    %14 = vsyncpa %s13, 0
    loop: start=0, step=1, limit=4
    $region2: #{tpu_custom_call.1} parent=1 // loop_pre_header
      _
    $region3: #{tpu_custom_call.1} parent=1 // loop_header
      %s16 = sphi 0, %s20
      %p17 = scmp.ge.s32.totalorder %s16, 4
      %s23 = sphi 0, %s35
      %s24 = sphi 0, %s31
      %s25 = sphi 0, %s23
      %s26 = sphi 0, %s24
      %s27 = sphi 0, %s25
      %s28 = sphi 0, %s26
      %s40 = sphi 0, %s42
      %s43 = sphi 0, %s40
      %s44 = sphi 0, %s43
      %s60 = sphi 0, %s44
      %s66 = sphi 0, %s68
      %s69 = sphi 0, %s66
      %s70 = sphi 0, %s69
      %s86 = sphi 0, %s70
      %s92 = sphi 0, %s94
      %s95 = sphi 0, %s92
      %s96 = sphi 0, %s95
      %s112 = sphi 0, %s96
      %s120 = sphi 0, %s122
      %s123 = sphi 0, %s120
      %s124 = sphi 0, %s123
      %s140 = sphi 0, %s124
    $region4: #{tpu_custom_call.1} parent=1 // loop_header_branch
      %19 = sbr.rel (%p17) target = $region8
    $region5: #{tpu_custom_call.1} parent=1 // loop_body
      %s21 = ssub.s32 %s16, 1
      %s22 = ssub.s32 %s16, 2
      %s29 = sadd.s32 1, %s24
      %p30 = scmp.ge.s32.totalorder %s29, 2
      %s31 = scalar_select %p30, 0, %s29
      %s32 = sadd.s32 1, %s23
      %s33 = scalar_select %p30, %s32, %s23
      %p34 = scmp.ge.s32.totalorder %s33, 1
      %s35 = scalar_select %p34, 0, %s33
      %s36 = ssub.s32 %s24, %s31
      %s37 = ssub.s32 %s23, %s35
      %s38 = sor.u32 %s36, %s37
      %p39 = scmp.eq.s32.totalorder %s38, 0
      %s41 = sadd.s32 %s40, 1
      %s42 = scalar_select %p39, %s40, %s41
      %p45 = pneg %p39
      %p46 = scmp.eq.s32.totalorder %s16, 1
      %p47 = por %p45, %p46
      %p48 = scmp.ne.s32.totalorder %s40, %s43
      %p49 = scmp.eq.s32.totalorder %s16, 0
      %p50 = por %p48, %p49
      %p51 = scmp.ne.s32.totalorder %s40, %s43
      %p52 = scmp.eq.s32.totalorder %s21, 1
      %p53 = por %p51, %p52
      %p54 = scmp.ne.s32.totalorder %s43, %s44
      %p55 = scmp.eq.s32.totalorder %s21, 0
      %p56 = por %p54, %p55
      %p57 = scmp.ne.s32.totalorder %s43, %s44
      %p58 = scmp.eq.s32.totalorder %s22, 1
      %p59 = por %p57, %p58
      %p61 = scmp.ne.s32.totalorder %s44, %s60
      %p62 = scmp.eq.s32.totalorder %s22, 0
      %p63 = por %p61, %p62
      %s64 = ssub.s32 %s23, %s35
      %p65 = scmp.eq.s32.totalorder %s64, 0
      %s67 = sadd.s32 %s66, 1
      %s68 = scalar_select %p65, %s66, %s67
      %p71 = pneg %p65
      %p72 = scmp.eq.s32.totalorder %s16, 1
      %p73 = por %p71, %p72
      %p74 = scmp.ne.s32.totalorder %s66, %s69
      %p75 = scmp.eq.s32.totalorder %s16, 0
      %p76 = por %p74, %p75
      %p77 = scmp.ne.s32.totalorder %s66, %s69
      %p78 = scmp.eq.s32.totalorder %s21, 1
      %p79 = por %p77, %p78
      %p80 = scmp.ne.s32.totalorder %s69, %s70
      %p81 = scmp.eq.s32.totalorder %s21, 0
      %p82 = por %p80, %p81
      %p83 = scmp.ne.s32.totalorder %s69, %s70
      %p84 = scmp.eq.s32.totalorder %s22, 1
      %p85 = por %p83, %p84
      %p87 = scmp.ne.s32.totalorder %s70, %s86
      %p88 = scmp.eq.s32.totalorder %s22, 0
      %p89 = por %p87, %p88
      %s90 = ssub.s32 %s23, %s35
      %p91 = scmp.eq.s32.totalorder %s90, 0
      %s93 = sadd.s32 %s92, 1
      %s94 = scalar_select %p91, %s92, %s93
      %p97 = pneg %p91
      %p98 = scmp.eq.s32.totalorder %s16, 1
      %p99 = por %p97, %p98
      %p100 = scmp.ne.s32.totalorder %s92, %s95
      %p101 = scmp.eq.s32.totalorder %s16, 0
      %p102 = por %p100, %p101
      %p103 = scmp.ne.s32.totalorder %s92, %s95
      %p104 = scmp.eq.s32.totalorder %s21, 1
      %p105 = por %p103, %p104
      %p106 = scmp.ne.s32.totalorder %s95, %s96
      %p107 = scmp.eq.s32.totalorder %s21, 0
      %p108 = por %p106, %p107
      %p109 = scmp.ne.s32.totalorder %s95, %s96
      %p110 = scmp.eq.s32.totalorder %s22, 1
      %p111 = por %p109, %p110
      %p113 = scmp.ne.s32.totalorder %s96, %s112
      %p114 = scmp.eq.s32.totalorder %s22, 0
      %p115 = por %p113, %p114
      %s116 = ssub.s32 %s24, %s31
      %s117 = ssub.s32 %s23, %s35
      %s118 = sor.u32 %s116, %s117
      %p119 = scmp.eq.s32.totalorder %s118, 0
      %s121 = sadd.s32 %s120, 1
      %s122 = scalar_select %p119, %s120, %s121
      %p125 = pneg %p119
      %p126 = scmp.eq.s32.totalorder %s16, 1
      %p127 = por %p125, %p126
      %p128 = scmp.ne.s32.totalorder %s120, %s123
      %p129 = scmp.eq.s32.totalorder %s16, 0
      %p130 = por %p128, %p129
      %p131 = scmp.ne.s32.totalorder %s120, %s123
      %p132 = scmp.eq.s32.totalorder %s21, 1
      %p133 = por %p131, %p132
      %p134 = scmp.ne.s32.totalorder %s123, %s124
      %p135 = scmp.eq.s32.totalorder %s21, 0
      %p136 = por %p134, %p135
      %p137 = scmp.ne.s32.totalorder %s123, %s124
      %p138 = scmp.eq.s32.totalorder %s22, 1
      %p139 = por %p137, %p138
      %p141 = scmp.ne.s32.totalorder %s124, %s140
      %p142 = scmp.eq.s32.totalorder %s22, 0
      %p143 = por %p141, %p142
      %p144 = scmp.le.s32.totalorder 1, %s16
      %p145 = scmp.lt.s32.totalorder %s16, 3
      %p146 = pnand %p144, %p145
      %p147 = pneg %p146
      // Predicated region
      $region9: #{tpu_custom_call.1} parent=5 // pred_check
        _
      $region10: #{tpu_custom_call.1} parent=5 // pred_check_branch
        %149 = sbr.rel (%p146) target = $region12
      $region11: #{tpu_custom_call.1} parent=5 // pred_region
        %s150 = ssub.s32 %s16, 1
        // Predicated region
        $region13: #{tpu_custom_call.1} parent=11 // pred_check
          %p151 = pneg %p82
        $region14: #{tpu_custom_call.1} parent=11 // pred_check_branch
          %153 = sbr.rel (%p151) target = $region16
        $region15: #{tpu_custom_call.1} parent=11 // pred_region
          %s155 = ssub.s32 128, 128
          %156 = vsyncadd [#allocation6], %s155
          %s157 = smul.addr %s25, 128
          %s158 = scalar_lea.hbm %s1, %s157
          %s160 = sshll.u32 [#allocation5], 4
          %s161 = int_to_ptr.vmem [resolvable:$true] %s160
          %163 = dma.hbm_to_vmem [thread:$0]  %s158, 128, %s161, [#allocation6]
        $region16: #{tpu_custom_call.1} parent=11 // pred_fallthru
          _
        // Predicated region
        $region17: #{tpu_custom_call.1} parent=11 // pred_check
          %p164 = pneg %p108
        $region18: #{tpu_custom_call.1} parent=11 // pred_check_branch
          %166 = sbr.rel (%p164) target = $region20
        $region19: #{tpu_custom_call.1} parent=11 // pred_region
          %s168 = ssub.s32 128, 128
          %169 = vsyncadd [#allocation6], %s168
          %s170 = smul.addr %s25, 128
          %s171 = scalar_lea.hbm %s2, %s170
          %s173 = sshll.u32 [#allocation7], 4
          %s174 = int_to_ptr.vmem [resolvable:$true] %s173
          %176 = dma.hbm_to_vmem [thread:$0]  %s171, 128, %s174, [#allocation6]
        $region20: #{tpu_custom_call.1} parent=11 // pred_fallthru
          _
      $region12: #{tpu_custom_call.1} parent=5 // pred_fallthru
        _
      %p177 = scmp.lt.s32.totalorder %s16, 2
      // Predicated region
      $region21: #{tpu_custom_call.1} parent=5 // pred_check
        %p178 = pneg %p177
      $region22: #{tpu_custom_call.1} parent=5 // pred_check_branch
        %180 = sbr.rel (%p178) target = $region24
      $region23: #{tpu_custom_call.1} parent=5 // pred_region
        // Predicated region
        $region25: #{tpu_custom_call.1} parent=23 // pred_check
          %p181 = pneg %p50
        $region26: #{tpu_custom_call.1} parent=23 // pred_check_branch
          %183 = sbr.rel (%p181) target = $region28
        $region27: #{tpu_custom_call.1} parent=23 // pred_region
          %s184 = sand.u32 %s40, 1
          %s185 = scalar_lea.sflag [#allocation3], %s184
          %s186 = sand.u32 %s40, 1
          %s187 = smul.addr %s186, 8
          %s188 = scalar_lea.vmem [#allocation2], %s187
          %s190 = ssub.s32 128, 128
          %191 = vsyncadd %s185, %s190
          %s192 = sadd.s32 %s23, %s24
          %s193 = smul.addr %s192, 128
          %s194 = scalar_lea.hbm %s0, %s193
          %s196 = sshll.u32 %s188, 4
          %s197 = int_to_ptr.vmem [resolvable:$true] %s196
          %199 = dma.hbm_to_vmem [thread:$0]  %s194, 128, %s197, %s185
        $region28: #{tpu_custom_call.1} parent=23 // pred_fallthru
          _
      $region24: #{tpu_custom_call.1} parent=5 // pred_fallthru
        _
      %p200 = scmp.le.s32.totalorder 1, %s16
      %p201 = scmp.lt.s32.totalorder %s16, 3
      %p202 = pnand %p200, %p201
      %p203 = pneg %p202
      // Predicated region
      $region29: #{tpu_custom_call.1} parent=5 // pred_check
        _
      $region30: #{tpu_custom_call.1} parent=5 // pred_check_branch
        %205 = sbr.rel (%p202) target = $region32
      $region31: #{tpu_custom_call.1} parent=5 // pred_region
        %s206 = ssub.s32 %s16, 1
        %s207 = sand.u32 %s43, 1
        %s208 = scalar_lea.sflag [#allocation3], %s207
        %s209 = sand.u32 %s43, 1
        %s210 = smul.addr %s209, 8
        %s211 = scalar_lea.vmem [#allocation2], %s210
        // Predicated region
        $region33: #{tpu_custom_call.1} parent=31 // pred_check
          %p212 = pneg %p56
        $region34: #{tpu_custom_call.1} parent=31 // pred_check_branch
          %214 = sbr.rel (%p212) target = $region36
        $region35: #{tpu_custom_call.1} parent=31 // pred_region
          %215 = dma.done %s208, 128
        $region36: #{tpu_custom_call.1} parent=31 // pred_fallthru
          _
        // Predicated region
        $region37: #{tpu_custom_call.1} parent=31 // pred_check
          %p216 = pneg %p82
        $region38: #{tpu_custom_call.1} parent=31 // pred_check_branch
          %218 = sbr.rel (%p216) target = $region40
        $region39: #{tpu_custom_call.1} parent=31 // pred_region
          %219 = dma.done [#allocation6], 128
        $region40: #{tpu_custom_call.1} parent=31 // pred_fallthru
          _
        // Predicated region
        $region41: #{tpu_custom_call.1} parent=31 // pred_check
          %p220 = pneg %p108
        $region42: #{tpu_custom_call.1} parent=31 // pred_check_branch
          %222 = sbr.rel (%p220) target = $region44
        $region43: #{tpu_custom_call.1} parent=31 // pred_region
          %223 = dma.done [#allocation6], 128
        $region44: #{tpu_custom_call.1} parent=31 // pred_fallthru
          _
        %s224 = sand.u32 %s43, 1
        %s225 = scalar_lea.sflag [#allocation3], %s224
        %s226 = sand.u32 %s43, 1
        %s227 = smul.addr %s226, 8
        %s228 = scalar_lea.vmem [#allocation2], %s227
        %p229 = pneg %p56
        %p230 = pneg %p53
        %p231 = pneg %p82
        %p232 = pneg %p79
        %p233 = pneg %p108
        %p234 = pneg %p105
        %p235 = pneg %p136
        %p236 = pneg %p133
        %s237 = sand.u32 %s123, 1
        %s238 = scalar_lea.sflag [#allocation4], %s237
        %s239 = sand.u32 %s123, 1
        %s240 = smul.addr %s239, 8
        %s241 = scalar_lea.vmem [#allocation8], %s240
        %v242 = vld [vmem:[%s211] sm:$0xff]
        %243 = vrot.lane.b32.xlu0 %v242, 112
        %v244 = vpop.permute.xlu0 %243
        %245 = vrot.lane.b32.xlu0 %v242, 16
        %v246 = vpop.permute.xlu0 %245
        %v247 = vlaneseq
        %v248 = vand.u32 %v247, 127
        %vm249 = vcmp.lt.s32.totalorder %v248, 0
        %v250 = vsub.s32 0, %v248
        %v251 = vsel %vm249, %v250, %v248
        %v252 = vshrl.u32 %v251, 5
        %v253 = vand.u32 %v251, 31
        %v254 = vsub.s32 0, %v253
        %v255 = vsel %vm249, %v254, %v253
        %vm256 = vcmp.ne.s32.totalorder %v255, 0
        %vm257 = vcmp.lt.s32.totalorder %v255, 0
        %vm258 = vmand %vm257, %vm256
        %v259 = vadd.s32 %v255, 32
        %v260 = vsel %vm258, %v259, %v255
        %vm261 = vcmp.lt.s32.totalorder %v260, 16
        %v262 = vsel %vm261, 1, 0
        %vm263 = vcmp.eq.s32.totalorder %v262, 1
        %v264 = vsel %vm263, %v244, %v246
        %v265 = vld [vmem:[#allocation5] sm:$0xff]
        %v266 = vmul.f32 %v242, %v265
        %v267 = vld [vmem:[#allocation7] sm:$0xff]
        %v268 = vmul.f32 %v264, %v267
        %v269 = vadd.f32 %v266, %v268
        %270 = vst [vmem:[%s241] sm:$0xff] %v269
        %s271 = sand.u32 %s123, 1
        %s272 = scalar_lea.sflag [#allocation4], %s271
        %s273 = sand.u32 %s123, 1
        %s274 = smul.addr %s273, 8
        %s275 = scalar_lea.vmem [#allocation8], %s274
        // Predicated region
        $region45: #{tpu_custom_call.1} parent=31 // pred_check
          %p276 = pneg %p133
        $region46: #{tpu_custom_call.1} parent=31 // pred_check_branch
          %278 = sbr.rel (%p276) target = $region48
        $region47: #{tpu_custom_call.1} parent=31 // pred_region
          %s280 = ssub.s32 128, 128
          %281 = vsyncadd %s272, %s280
          %s282 = sadd.s32 %s25, %s26
          %s283 = smul.addr %s282, 128
          %s284 = scalar_lea.hbm %s3, %s283
          %s286 = sshll.u32 %s275, 4
          %s287 = int_to_ptr.vmem [resolvable:$true] %s286
          %289 = dma.vmem_to_hbm [thread:$0]  %s287, 128, %s284, %s272
        $region48: #{tpu_custom_call.1} parent=31 // pred_fallthru
          _
      $region32: #{tpu_custom_call.1} parent=5 // pred_fallthru
        _
      %p290 = scmp.le.s32.totalorder 2, %s16
      // Predicated region
      $region49: #{tpu_custom_call.1} parent=5 // pred_check
        %p291 = pneg %p290
      $region50: #{tpu_custom_call.1} parent=5 // pred_check_branch
        %293 = sbr.rel (%p291) target = $region52
      $region51: #{tpu_custom_call.1} parent=5 // pred_region
        %s294 = ssub.s32 %s16, 2
        // Predicated region
        $region53: #{tpu_custom_call.1} parent=51 // pred_check
          %p295 = pneg %p139
        $region54: #{tpu_custom_call.1} parent=51 // pred_check_branch
          %297 = sbr.rel (%p295) target = $region56
        $region55: #{tpu_custom_call.1} parent=51 // pred_region
          %s298 = sand.u32 %s124, 1
          %s299 = scalar_lea.sflag [#allocation4], %s298
          %s300 = sand.u32 %s124, 1
          %s301 = smul.addr %s300, 8
          %s302 = scalar_lea.vmem [#allocation8], %s301
          %303 = dma.done %s299, 128
        $region56: #{tpu_custom_call.1} parent=51 // pred_fallthru
          _
      $region52: #{tpu_custom_call.1} parent=5 // pred_fallthru
        _
    $region6: #{tpu_custom_call.1} parent=1 // loop_footer
      %s20 = sadd.s32 1, %s16
    $region7: #{tpu_custom_call.1} parent=1 // loop_footer_branch
      %15 = sbr.rel target = $region3
    $region8: #{tpu_custom_call.1} parent=1 // loop_exit
      _
    %304 = vsyncpa [#allocation3], 1
    %s305 = scalar_lea.sflag [#allocation3], 1
    %306 = vsyncpa %s305, 1
    %307 = vsyncpa [#allocation6], 1
    %308 = vsyncpa [#allocation4], 1
    %s309 = scalar_lea.sflag [#allocation4], 1
    %310 = vsyncpa %s309, 1

</llo_original>
